<compile_context>
chip_gen: v5e
topology: v5e:2x2
jax: 0.10.0
libtpu: 0.0.40
codegen_flags: <defaults>
</compile_context>

<pallas_src>
import functools

import jax
import jax.numpy as jnp
from jax.experimental import pallas as pl
from jax.experimental.pallas import tpu as pltpu

LANE = 128
SUBLANE = 8


def _round_up(x, m):
    return (x + m - 1) // m * m


# ---------------------------------------------------------------------------
# Probe: can we single-buffer the resident (constant index_map) blocks?
# ---------------------------------------------------------------------------
def _probe_single_buffer():
    try:
        pl.BlockSpec((SUBLANE, LANE), lambda i: (0, 0),
                     pipeline_mode=pl.Buffered(1))
        return True
    except Exception:
        return False


_SINGLE_BUFFER_RESIDENT = _probe_single_buffer()
_RESIDENT_FACTOR = 1 if _SINGLE_BUFFER_RESIDENT else 2


def _resident_spec(shape):
    """BlockSpec for an operand that stays resident across all grid steps."""
    if _SINGLE_BUFFER_RESIDENT:
        return pl.BlockSpec(shape, lambda i: (0, 0),
                            pipeline_mode=pl.Buffered(1))
    return pl.BlockSpec(shape, lambda i: (0, 0))


# ---------------------------------------------------------------------------
# Kernel
# ---------------------------------------------------------------------------
def mlp_kernel(x_ref, w1_ref, b1_ref, w2_ref, b2_ref, o_ref):
    """Fused 2-layer MLP tile: out = relu(x @ W1 + b1) @ W2 + b2.

    x_ref:  (bb, F)      f32   (cast to bf16 in-register for the MXU)
    w1_ref: (F,  Hp)     bf16  (H lane-padded, padded cols are zero)
    b1_ref: (1,  Hp)     f32
    w2_ref: (Hp, Op)     bf16  (padded rows/cols are zero)
    b2_ref: (1,  O)      f32
    o_ref:  (bb, O)      f32   (exact O lanes -> no wrapper slice pass)
    """
    # Layer 1: bf16 operands on the MXU, f32 accumulate.
    x_bf = x_ref[...].astype(jnp.bfloat16)
    h = jnp.dot(x_bf, w1_ref[...], preferred_element_type=jnp.float32)
    # Bias + ReLU epilogue on the f32 accumulator (VPU-friendly on all gens).
    h = jnp.maximum(h + b1_ref[...], 0.0)
    # Layer 2.
    o = jnp.dot(h.astype(jnp.bfloat16), w2_ref[...],
                preferred_element_type=jnp.float32)
    n_out = o_ref.shape[-1]
    o_ref[...] = (o[:, :n_out] + b2_ref[...]).astype(o_ref.dtype)


# ---------------------------------------------------------------------------
# Sizing helpers
# ---------------------------------------------------------------------------
def _vmem_config(vmem_budget_bytes=None):
    """Per-generation VMEM budget / scoped limit, kept coupled."""
    try:
        cap = int(pltpu.get_tpu_info().vmem_capacity_bytes)
    except Exception:
        cap = 64 << 20  # conservative fallback (v7x per-TC VMEM)
    if vmem_budget_bytes is None:
        # ~75% of physical minus fixed headroom for compiler scratch.
        vmem_budget_bytes = (cap * 3) // 4 - (4 << 20)
    vmem_limit_bytes = min(cap, vmem_budget_bytes + (8 << 20))
    vmem_budget_bytes = min(vmem_budget_bytes, vmem_limit_bytes - (4 << 20))
    return int(max(vmem_budget_bytes, 8 << 20)), int(max(vmem_limit_bytes, 16 << 20))


def _choose_block_batch(batch, in_features, h_pad, o_pad, budget_bytes,
                        resident_factor):
    """Largest batch tile (multiple of 8, <=1024) whose pipelined footprint
    (tiles + in-kernel intermediates + resident weights) fits the budget,
    while keeping >=2 (ideally >=4) grid steps for megacore + DMA overlap."""
    f_lanes = _round_up(in_features, LANE)   # VMEM layout of the x tile
    o_lanes = _round_up(o_pad, LANE)

    resident = resident_factor * (
        _round_up(in_features, SUBLANE) * h_pad * 2   # W1 bf16
        + SUBLANE * h_pad * 4                          # b1 f32
        + h_pad * o_pad * 2                            # W2 bf16
        + SUBLANE * o_lanes * 4)                       # b2 f32

    per_row = (2 * f_lanes * 4       # x f32 tile, double-buffered
               + f_lanes * 2         # in-kernel bf16 cast of x
               + h_pad * 4           # intermediate h (f32)
               + h_pad * 2           # bf16 copy of h for layer-2 MXU
               + o_pad * 4           # layer-2 f32 accumulator
               + 2 * o_lanes * 4)    # out tile (lane-padded layout), dbl-buf

    avail = budget_bytes - resident
    tb = avail // max(per_row, 1)
    tb = (tb // SUBLANE) * SUBLANE

    # Guarantee multiple grid steps when the batch allows it (megacore on v7x,
    # input/output DMA prefetch overlap everywhere).
    target_steps = 4 if batch >= 4 * SUBLANE else 2
    cap_steps = _round_up((batch + target_steps - 1) // target_steps, SUBLANE)

    tb = min(tb, 1024, cap_steps)
    tb = max(tb, SUBLANE)
    return int(min(tb, _round_up(batch, SUBLANE)))


# ---------------------------------------------------------------------------
# Parameter preparation (done ONCE, outside the jitted forward)
# ---------------------------------------------------------------------------
def prepare_params(w1, b1, w2, b2):
    """Pad hidden/output feature dims of the weights to 128 lanes and cast the
    matmul operands to bf16.  Zero padding is exact: padded hidden columns give
    relu(0+0)=0 and the matching zero rows of W2 contribute nothing; padded
    output columns are dropped in-kernel before the store.

    w1: [F, H], b1: [1, H], w2: [H, O], b2: [1, O]   (already [in, out] layout
    vs torch.nn.Linear's [out, in]).
    """
    F, H = w1.shape
    H2, O = w2.shape
    assert H2 == H and b1.shape == (1, H) and b2.shape == (1, O)
    h_pad = _round_up(H, LANE)
    o_pad = _round_up(O, LANE)

    w1p = jnp.zeros((F, h_pad), jnp.bfloat16).at[:, :H].set(
        w1.astype(jnp.bfloat16))
    b1p = jnp.zeros((1, h_pad), jnp.float32).at[:, :H].set(
        b1.astype(jnp.float32))
    w2p = jnp.zeros((h_pad, o_pad), jnp.bfloat16).at[:H, :O].set(
        w2.astype(jnp.bfloat16))
    b2p = b2.astype(jnp.float32).reshape(1, O)   # kept un-padded: O read from here
    return w1p, b1p, w2p, b2p


# ---------------------------------------------------------------------------
# Forward
# ---------------------------------------------------------------------------
@functools.partial(jax.jit, static_argnames=("block_batch", "vmem_limit_bytes"))
def _mlp_pallas(x, w1p, b1p, w2p, b2p, *, block_batch, vmem_limit_bytes):
    B, F = x.shape
    h_pad = w1p.shape[1]
    o_pad = w2p.shape[1]
    O = b2p.shape[1]

    grid = (pl.cdiv(B, block_batch),)
    return pl.pallas_call(
        mlp_kernel,
        out_shape=jax.ShapeDtypeStruct((B, O), jnp.float32),
        grid_spec=pltpu.PrefetchScalarGridSpec(
            num_scalar_prefetch=0,
            grid=grid,
            in_specs=[
                # x tile: f32, full (un-padded) F extent; cast happens in-kernel.
                pl.BlockSpec((block_batch, F), lambda i: (i, 0)),
                _resident_spec((F, h_pad)),      # W1 (bf16), resident
                _resident_spec((1, h_pad)),      # b1 (f32), resident
                _resident_spec((h_pad, o_pad)),  # W2 (bf16), resident
                _resident_spec((1, O)),          # b2 (f32), resident
            ],
            # Exact-O output block: no lane padding, no wrapper-side slice.
            out_specs=pl.BlockSpec((block_batch, O), lambda i: (i, 0)),
        ),
        compiler_params=pltpu.CompilerParams(
            dimension_semantics=("parallel",),   # megacore-shard batch on v7x
            vmem_limit_bytes=vmem_limit_bytes,   # coupled to the sizing budget
        ),
    )(x, w1p, b1p, w2p, b2p)


def example_model_forward(x, params, *, block_batch=None, vmem_budget_bytes=None):
    """x: [B, F] f32.  params = prepare_params(w1, b1, w2, b2) (call once)."""
    w1p, b1p, w2p, b2p = params
    B, F = x.shape
    assert w1p.shape[0] == F
    h_pad = w1p.shape[1]
    o_pad = w2p.shape[1]

    budget, limit = _vmem_config(vmem_budget_bytes)
    if block_batch is None:
        block_batch = _choose_block_batch(B, F, h_pad, o_pad, budget,
                                          _RESIDENT_FACTOR)
    return _mlp_pallas(x, w1p, b1p, w2p, b2p,
                       block_batch=int(block_batch),
                       vmem_limit_bytes=int(limit))


# ---------------------------------------------------------------------------
# Deterministic init mirroring torch.nn.Linear default:
# U(-1/sqrt(fan_in), 1/sqrt(fan_in)); weights stored transposed [in, out].
# ---------------------------------------------------------------------------
def init_params(key, in_features, hidden_dims, output_dims):
    k1, k2, k3, k4 = jax.random.split(key, 4)
    lim1 = 1.0 / jnp.sqrt(jnp.float32(in_features))
    lim2 = 1.0 / jnp.sqrt(jnp.float32(hidden_dims))
    w1 = jax.random.uniform(k1, (in_features, hidden_dims),
                            minval=-lim1, maxval=lim1, dtype=jnp.float32)
    b1 = jax.random.uniform(k2, (1, hidden_dims),
                            minval=-lim1, maxval=lim1, dtype=jnp.float32)
    w2 = jax.random.uniform(k3, (hidden_dims, output_dims),
                            minval=-lim2, maxval=lim2, dtype=jnp.float32)
    b2 = jax.random.uniform(k4, (1, output_dims),
                            minval=-lim2, maxval=lim2, dtype=jnp.float32)
    return w1, b1, w2, b2


if __name__ == "__main__":
    # Small shapes consistent with the module defaults: hidden_dims=8,
    # output_dims=1; `in_features_specified_by_data` fixed to 32 here.
    batch = 16
    in_features = 32
    hidden_dims = 8
    output_dims = 1

    key = jax.random.PRNGKey(0)
    kx, kp = jax.random.split(key)
    x = jax.random.normal(kx, (batch, in_features), dtype=jnp.float32)
    w1, b1, w2, b2 = init_params(kp, in_features, hidden_dims, output_dims)

    # Weights padded/cast once, outside the jitted per-call forward.
    params = prepare_params(w1, b1, w2, b2)

    out = example_model_forward(x, params)
    out = jax.block_until_ready(out)

    # Pure-JAX f32 reference (loose tolerance: kernel uses bf16 MXU operands).
    ref = jnp.maximum(x @ w1 + b1, 0.0) @ w2 + b2
    assert out.shape == (batch, output_dims), out.shape
    assert jnp.allclose(out, ref, atol=5e-2, rtol=5e-2), "mismatch vs reference"

    # NOTE: self.criterion (BCEWithLogitsLoss) is training-only and not part of
    # forward(); the forward returns raw logits, as implemented here.
    print("KERNEL_OK")
</pallas_src>

<mosaic_0001>
module attributes {stable_mosaic.version = 11 : i64} {
  func.func @mlp_kernel(%arg0: i32, %arg1: memref<8x32xf32, #tpu.memory_space<vmem>>, %arg2: memref<32x128xbf16, #tpu.memory_space<vmem>>, %arg3: memref<1x128xf32, #tpu.memory_space<vmem>>, %arg4: memref<128x128xbf16, #tpu.memory_space<vmem>>, %arg5: memref<1x1xf32, #tpu.memory_space<vmem>>, %arg6: memref<8x1xf32, #tpu.memory_space<vmem>>) attributes {dimension_semantics = [#tpu.dimension_semantics<parallel>], iteration_bounds = array<i64: 2>, scalar_prefetch = 0 : i64, scratch_operands = 0 : i64, tpu.core_type = #tpu.core_type<tc>, window_params = [{transform_indices = @transform_0, window_bounds = array<i64: 8, 32>}, {pipeline_mode = #tpu.pipeline_mode<synchronous>, transform_indices = @transform_1, window_bounds = array<i64: 32, 128>}, {pipeline_mode = #tpu.pipeline_mode<synchronous>, transform_indices = @transform_2, window_bounds = array<i64: 1, 128>}, {pipeline_mode = #tpu.pipeline_mode<synchronous>, transform_indices = @transform_3, window_bounds = array<i64: 128, 128>}, {pipeline_mode = #tpu.pipeline_mode<synchronous>, transform_indices = @transform_4, window_bounds = array<i64: 1, 1>}, {transform_indices = @transform_5, window_bounds = array<i64: 8, 1>}]} {
    %c0 = arith.constant 0 : index
    %c0_0 = arith.constant 0 : index
    %0 = vector.load %arg1[%c0, %c0_0] : memref<8x32xf32, #tpu.memory_space<vmem>>, vector<8x32xf32>
    %1 = arith.truncf %0 : vector<8x32xf32> to vector<8x32xbf16>
    %c0_1 = arith.constant 0 : index
    %c0_2 = arith.constant 0 : index
    %2 = vector.load %arg2[%c0_1, %c0_2] : memref<32x128xbf16, #tpu.memory_space<vmem>>, vector<32x128xbf16>
    %cst = arith.constant dense<0.000000e+00> : vector<8x128xf32>
    %3 = tpu.matmul %1, %2, %cst {dimension_numbers = #tpu.dot_dimension_numbers<[1], [0], [0], [1], [0, 0, 1, 1], [], []>} : vector<8x32xbf16>, vector<32x128xbf16>, vector<8x128xf32> -> vector<8x128xf32>
    %c0_3 = arith.constant 0 : index
    %c0_4 = arith.constant 0 : index
    %4 = vector.load %arg3[%c0_3, %c0_4] : memref<1x128xf32, #tpu.memory_space<vmem>>, vector<1x128xf32>
    %5 = vector.broadcast %4 : vector<1x128xf32> to vector<8x128xf32>
    %6 = arith.addf %3, %5 : vector<8x128xf32>
    %cst_5 = arith.constant 0.000000e+00 : f32
    %7 = vector.broadcast %cst_5 : f32 to vector<8x128xf32>
    %8 = arith.maximumf %6, %7 : vector<8x128xf32>
    %9 = arith.truncf %8 : vector<8x128xf32> to vector<8x128xbf16>
    %c0_6 = arith.constant 0 : index
    %c0_7 = arith.constant 0 : index
    %10 = vector.load %arg4[%c0_6, %c0_7] : memref<128x128xbf16, #tpu.memory_space<vmem>>, vector<128x128xbf16>
    %cst_8 = arith.constant dense<0.000000e+00> : vector<8x128xf32>
    %11 = tpu.matmul %9, %10, %cst_8 {dimension_numbers = #tpu.dot_dimension_numbers<[1], [0], [0], [1], [0, 0, 1, 1], [], []>} : vector<8x128xbf16>, vector<128x128xbf16>, vector<8x128xf32> -> vector<8x128xf32>
    %12 = vector.extract_strided_slice %11 {offsets = [0, 0], sizes = [8, 1], strides = [1, 1]} : vector<8x128xf32> to vector<8x1xf32>
    %c0_9 = arith.constant 0 : index
    %c0_10 = arith.constant 0 : index
    %13 = vector.load %arg5[%c0_9, %c0_10] : memref<1x1xf32, #tpu.memory_space<vmem>>, vector<1x1xf32>
    %14 = vector.broadcast %13 : vector<1x1xf32> to vector<8x1xf32>
    %15 = arith.addf %12, %14 : vector<8x1xf32>
    %c0_11 = arith.constant 0 : index
    %c0_12 = arith.constant 0 : index
    %16 = vector.load %arg6[%c0_11, %c0_12] : memref<8x1xf32, #tpu.memory_space<vmem>>, vector<8x1xf32>
    tpu.vector_store %arg6[%c0_11, %c0_12], %15 {strides = array<i32>} : memref<8x1xf32, #tpu.memory_space<vmem>>, vector<8x1xf32>,
    return
  }
  func.func @transform_0(%arg0: i32) -> (i32, i32) {
    %c0_i32 = arith.constant 0 : i32
    %c0_i32_0 = arith.constant 0 : i32
    return %arg0, %c0_i32 : i32, i32
  }
  func.func @transform_1(%arg0: i32) -> (i32, i32) {
    %c0_i32 = arith.constant 0 : i32
    %c0_i32_0 = arith.constant 0 : i32
    %c0_i32_1 = arith.constant 0 : i32
    return %c0_i32, %c0_i32_0 : i32, i32
  }
  func.func @transform_2(%arg0: i32) -> (i32, i32) {
    %c0_i32 = arith.constant 0 : i32
    %c0_i32_0 = arith.constant 0 : i32
    %c0_i32_1 = arith.constant 0 : i32
    return %c0_i32, %c0_i32_0 : i32, i32
  }
  func.func @transform_3(%arg0: i32) -> (i32, i32) {
    %c0_i32 = arith.constant 0 : i32
    %c0_i32_0 = arith.constant 0 : i32
    %c0_i32_1 = arith.constant 0 : i32
    return %c0_i32, %c0_i32_0 : i32, i32
  }
  func.func @transform_4(%arg0: i32) -> (i32, i32) {
    %c0_i32 = arith.constant 0 : i32
    %c0_i32_0 = arith.constant 0 : i32
    %c0_i32_1 = arith.constant 0 : i32
    return %c0_i32, %c0_i32_0 : i32, i32
  }
  func.func @transform_5(%arg0: i32) -> (i32, i32) {
    %c0_i32 = arith.constant 0 : i32
    %c0_i32_0 = arith.constant 0 : i32
    return %arg0, %c0_i32 : i32, i32
  }
}

</mosaic_0001>

<llo_original>
// kernel: _mlp_pallas.1
$region0: #{_mlp_pallas.1}
  #allocation0 [shape = 'u32[]', space=smem, size = 0x4, offset = 0x4, fixed_abs, tag = 'smem constant byte address 0x4 - core index']
  #allocation1 [shape = 'u32[72,128]{1,0:T(1,128)}', space=vmem, size = 0x9000, scoped, tag = 'internal scratch']
  #allocation2 [shape = 'f32[1,1]{1,0:T(1,128)S(1)}', space=vmem, size = 0x200, scoped, tag = 'scoped memory for _mlp_pallas.1']
  %s0 = inlined_call_operand.hbm [shape: f32[16,32], index: 0, kind: input, shape index: {}]
  %s1 = inlined_call_operand.hbm [shape: bf16[32,128], index: 1, kind: input, shape index: {}]
  %s2 = inlined_call_operand.vmem [shape: f32[1,128], index: 2, kind: input, shape index: {}]
  %s3 = inlined_call_operand.hbm [shape: bf16[128,128], index: 3, kind: input, shape index: {}]
  %s4 = inlined_call_operand.<no memory space> [shape: f32[1,1], index: 4, kind: input, shape index: {}]
  %s5 = inlined_call_operand.vmem [shape: f32[16,1], index: 5, kind: output, shape index: {}]
  %s6 = sld [smem:[#allocation0]]
  $region65: #{_mlp_pallas.1} parent=0
    _
  %s8 = ssub.s32 1, %s6
  %s9 = scalar_select 0, %s8, %s6
  %v10 = vstv %s4
  %11 = vst [vmem:[#allocation2] sm:$0x1] %v10
  $region1: #{_mlp_pallas.1} parent=0
    #allocation3 [shape = 'u8[8192]{0}', space=vmem, size = 0x2000, scoped, tag = 'input window, operand 0']
    #allocation4 [shape = 's32[2]{0}', space=sflag, size = 0x8, scoped, tag = 'scoped memory for _mlp_pallas.1']
    #allocation5 [shape = 'u8[8192]{0}', space=vmem, size = 0x2000, scoped, tag = 'input window, operand 1, single buffered']
    #allocation6 [shape = 's32[1]{0}', space=sflag, size = 0x4, scoped, tag = 'scoped memory for _mlp_pallas.1']
    #allocation7 [shape = 'u8[32768]{0}', space=vmem, size = 0x8000, scoped, tag = 'input window, operand 3, single buffered']
    %12 = vsyncpa [#allocation4], 0
    %s13 = scalar_lea.sflag [#allocation4], 1
    %14 = vsyncpa %s13, 0
    %15 = vsyncpa [#allocation6], 0
    loop: start=0, step=1, limit=4
    $region2: #{_mlp_pallas.1} parent=1 // loop_pre_header
      _
    $region3: #{_mlp_pallas.1} parent=1 // loop_header
      %s17 = sphi 0, %s21
      %p18 = scmp.ge.s32.totalorder %s17, 4
      %s27 = sphi 0, %s29
      %s30 = sphi 0, %s27
      %s31 = sphi 0, %s30
      %s47 = sphi 0, %s31
      %s51 = sphi 0, %s51
      %s53 = sphi 0, %s51
      %s54 = sphi 0, %s53
      %s68 = sphi 0, %s54
      %s72 = sphi 0, %s72
      %s74 = sphi 0, %s72
      %s75 = sphi 0, %s74
      %s89 = sphi 0, %s75
      %s93 = sphi 0, %s93
      %s95 = sphi 0, %s93
      %s96 = sphi 0, %s95
      %s110 = sphi 0, %s96
      %s114 = sphi 0, %s114
      %s116 = sphi 0, %s114
      %s117 = sphi 0, %s116
      %s131 = sphi 0, %s117
      %s137 = sphi 0, %s139
      %s140 = sphi 0, %s137
      %s141 = sphi 0, %s140
      %s157 = sphi 0, %s141
    $region4: #{_mlp_pallas.1} parent=1 // loop_header_branch
      %20 = sbr.rel (%p18) target = $region8
    $region5: #{_mlp_pallas.1} parent=1 // loop_body
      %s22 = ssub.s32 %s17, 1
      %s23 = ssub.s32 %s17, 2
      %s24 = sadd.s32 %s17, 1
      %s25 = ssub.s32 %s17, %s24
      %p26 = scmp.eq.s32.totalorder %s25, 0
      %s28 = sadd.s32 %s27, 1
      %s29 = scalar_select %p26, %s27, %s28
      %p32 = pneg %p26
      %p33 = scmp.eq.s32.totalorder %s17, 1
      %p34 = por %p32, %p33
      %p35 = scmp.ne.s32.totalorder %s27, %s30
      %p36 = scmp.eq.s32.totalorder %s17, 0
      %p37 = por %p35, %p36
      %p38 = scmp.ne.s32.totalorder %s27, %s30
      %p39 = scmp.eq.s32.totalorder %s22, 1
      %p40 = por %p38, %p39
      %p41 = scmp.ne.s32.totalorder %s30, %s31
      %p42 = scmp.eq.s32.totalorder %s22, 0
      %p43 = por %p41, %p42
      %p44 = scmp.ne.s32.totalorder %s30, %s31
      %p45 = scmp.eq.s32.totalorder %s23, 1
      %p46 = por %p44, %p45
      %p48 = scmp.ne.s32.totalorder %s31, %s47
      %p49 = scmp.eq.s32.totalorder %s23, 0
      %p50 = por %p48, %p49
      %s52 = sadd.s32 %s51, 1
      %p55 = scmp.eq.s32.totalorder %s17, 1
      %p56 = scmp.ne.s32.totalorder %s51, %s53
      %p57 = scmp.eq.s32.totalorder %s17, 0
      %p58 = por %p56, %p57
      %p59 = scmp.ne.s32.totalorder %s51, %s53
      %p60 = scmp.eq.s32.totalorder %s22, 1
      %p61 = por %p59, %p60
      %p62 = scmp.ne.s32.totalorder %s53, %s54
      %p63 = scmp.eq.s32.totalorder %s22, 0
      %p64 = por %p62, %p63
      %p65 = scmp.ne.s32.totalorder %s53, %s54
      %p66 = scmp.eq.s32.totalorder %s23, 1
      %p67 = por %p65, %p66
      %p69 = scmp.ne.s32.totalorder %s54, %s68
      %p70 = scmp.eq.s32.totalorder %s23, 0
      %p71 = por %p69, %p70
      %s73 = sadd.s32 %s72, 1
      %p76 = scmp.eq.s32.totalorder %s17, 1
      %p77 = scmp.ne.s32.totalorder %s72, %s74
      %p78 = scmp.eq.s32.totalorder %s17, 0
      %p79 = por %p77, %p78
      %p80 = scmp.ne.s32.totalorder %s72, %s74
      %p81 = scmp.eq.s32.totalorder %s22, 1
      %p82 = por %p80, %p81
      %p83 = scmp.ne.s32.totalorder %s74, %s75
      %p84 = scmp.eq.s32.totalorder %s22, 0
      %p85 = por %p83, %p84
      %p86 = scmp.ne.s32.totalorder %s74, %s75
      %p87 = scmp.eq.s32.totalorder %s23, 1
      %p88 = por %p86, %p87
      %p90 = scmp.ne.s32.totalorder %s75, %s89
      %p91 = scmp.eq.s32.totalorder %s23, 0
      %p92 = por %p90, %p91
      %s94 = sadd.s32 %s93, 1
      %p97 = scmp.eq.s32.totalorder %s17, 1
      %p98 = scmp.ne.s32.totalorder %s93, %s95
      %p99 = scmp.eq.s32.totalorder %s17, 0
      %p100 = por %p98, %p99
      %p101 = scmp.ne.s32.totalorder %s93, %s95
      %p102 = scmp.eq.s32.totalorder %s22, 1
      %p103 = por %p101, %p102
      %p104 = scmp.ne.s32.totalorder %s95, %s96
      %p105 = scmp.eq.s32.totalorder %s22, 0
      %p106 = por %p104, %p105
      %p107 = scmp.ne.s32.totalorder %s95, %s96
      %p108 = scmp.eq.s32.totalorder %s23, 1
      %p109 = por %p107, %p108
      %p111 = scmp.ne.s32.totalorder %s96, %s110
      %p112 = scmp.eq.s32.totalorder %s23, 0
      %p113 = por %p111, %p112
      %s115 = sadd.s32 %s114, 1
      %p118 = scmp.eq.s32.totalorder %s17, 1
      %p119 = scmp.ne.s32.totalorder %s114, %s116
      %p120 = scmp.eq.s32.totalorder %s17, 0
      %p121 = por %p119, %p120
      %p122 = scmp.ne.s32.totalorder %s114, %s116
      %p123 = scmp.eq.s32.totalorder %s22, 1
      %p124 = por %p122, %p123
      %p125 = scmp.ne.s32.totalorder %s116, %s117
      %p126 = scmp.eq.s32.totalorder %s22, 0
      %p127 = por %p125, %p126
      %p128 = scmp.ne.s32.totalorder %s116, %s117
      %p129 = scmp.eq.s32.totalorder %s23, 1
      %p130 = por %p128, %p129
      %p132 = scmp.ne.s32.totalorder %s117, %s131
      %p133 = scmp.eq.s32.totalorder %s23, 0
      %p134 = por %p132, %p133
      %s135 = ssub.s32 %s17, %s24
      %p136 = scmp.eq.s32.totalorder %s135, 0
      %s138 = sadd.s32 %s137, 1
      %s139 = scalar_select %p136, %s137, %s138
      %p142 = pneg %p136
      %p143 = scmp.eq.s32.totalorder %s17, 1
      %p144 = por %p142, %p143
      %p145 = scmp.ne.s32.totalorder %s137, %s140
      %p146 = scmp.eq.s32.totalorder %s17, 0
      %p147 = por %p145, %p146
      %p148 = scmp.ne.s32.totalorder %s137, %s140
      %p149 = scmp.eq.s32.totalorder %s22, 1
      %p150 = por %p148, %p149
      %p151 = scmp.ne.s32.totalorder %s140, %s141
      %p152 = scmp.eq.s32.totalorder %s22, 0
      %p153 = por %p151, %p152
      %p154 = scmp.ne.s32.totalorder %s140, %s141
      %p155 = scmp.eq.s32.totalorder %s23, 1
      %p156 = por %p154, %p155
      %p158 = scmp.ne.s32.totalorder %s141, %s157
      %p159 = scmp.eq.s32.totalorder %s23, 0
      %p160 = por %p158, %p159
      %p161 = scmp.le.s32.totalorder 1, %s17
      %p162 = scmp.lt.s32.totalorder %s17, 3
      %p163 = pnand %p161, %p162
      %p164 = pneg %p163
      // Predicated region
      $region9: #{_mlp_pallas.1} parent=5 // pred_check
        _
      $region10: #{_mlp_pallas.1} parent=5 // pred_check_branch
        %166 = sbr.rel (%p163) target = $region12
      $region11: #{_mlp_pallas.1} parent=5 // pred_region
        %s167 = ssub.s32 %s17, 1
        // Predicated region
        $region13: #{_mlp_pallas.1} parent=11 // pred_check
          %p168 = pneg %p64
        $region14: #{_mlp_pallas.1} parent=11 // pred_check_branch
          %170 = sbr.rel (%p168) target = $region16
        $region15: #{_mlp_pallas.1} parent=11 // pred_region
          %172 = vsyncadd [#allocation6], 0
          %s173 = sshll.u32 %s1, 4
          %s174 = int_to_ptr.hbm [resolvable:$true] %s173
          %s175 = sshll.u32 [#allocation5], 4
          %s176 = int_to_ptr.vmem [resolvable:$true] %s175
          %181 = dma.hbm_to_vmem [thread:$0]  %s174, 256, %s176, [#allocation6], 64, 64, 4
        $region16: #{_mlp_pallas.1} parent=11 // pred_fallthru
          _
        // Predicated region
        $region17: #{_mlp_pallas.1} parent=11 // pred_check
          %p182 = pneg %p85
        $region18: #{_mlp_pallas.1} parent=11 // pred_check_branch
          %184 = sbr.rel (%p182) target = $region20
        $region19: #{_mlp_pallas.1} parent=11 // pred_region
          _
        $region20: #{_mlp_pallas.1} parent=11 // pred_fallthru
          _
        // Predicated region
        $region21: #{_mlp_pallas.1} parent=11 // pred_check
          %p185 = pneg %p106
        $region22: #{_mlp_pallas.1} parent=11 // pred_check_branch
          %187 = sbr.rel (%p185) target = $region24
        $region23: #{_mlp_pallas.1} parent=11 // pred_region
          %189 = vsyncadd [#allocation6], 0
          %s190 = sshll.u32 %s3, 4
          %s191 = int_to_ptr.hbm [resolvable:$true] %s190
          %s192 = sshll.u32 [#allocation7], 4
          %s193 = int_to_ptr.vmem [resolvable:$true] %s192
          %198 = dma.hbm_to_vmem [thread:$0]  %s191, 1024, %s193, [#allocation6], 64, 64, 4
        $region24: #{_mlp_pallas.1} parent=11 // pred_fallthru
          _
        // Predicated region
        $region25: #{_mlp_pallas.1} parent=11 // pred_check
          %p199 = pneg %p127
        $region26: #{_mlp_pallas.1} parent=11 // pred_check_branch
          %201 = sbr.rel (%p199) target = $region28
        $region27: #{_mlp_pallas.1} parent=11 // pred_region
          _
        $region28: #{_mlp_pallas.1} parent=11 // pred_fallthru
          _
      $region12: #{_mlp_pallas.1} parent=5 // pred_fallthru
        _
      %p202 = scmp.lt.s32.totalorder %s17, 2
      // Predicated region
      $region29: #{_mlp_pallas.1} parent=5 // pred_check
        %p203 = pneg %p202
      $region30: #{_mlp_pallas.1} parent=5 // pred_check_branch
        %205 = sbr.rel (%p203) target = $region32
      $region31: #{_mlp_pallas.1} parent=5 // pred_region
        // Predicated region
        $region33: #{_mlp_pallas.1} parent=31 // pred_check
          %p206 = pneg %p37
        $region34: #{_mlp_pallas.1} parent=31 // pred_check_branch
          %208 = sbr.rel (%p206) target = $region36
        $region35: #{_mlp_pallas.1} parent=31 // pred_region
          %s209 = sand.u32 %s27, 1
          %s210 = scalar_lea.sflag [#allocation4], %s209
          %s211 = sand.u32 %s27, 1
          %s212 = smul.addr %s211, 8
          %s213 = scalar_lea.vmem [#allocation3], %s212
          %215 = vsyncadd %s210, 0
          %s216 = smul.addr %s17, 8
          %s217 = scalar_lea.hbm %s0, %s216
          %s219 = sshll.u32 %s217, 4
          %s220 = int_to_ptr.hbm [resolvable:$true] %s219
          %s221 = sshll.u32 %s213, 4
          %s222 = int_to_ptr.vmem [resolvable:$true] %s221
          %224 = dma.hbm_to_vmem [thread:$0]  %s220, 128, %s222, %s210
        $region36: #{_mlp_pallas.1} parent=31 // pred_fallthru
          _
      $region32: #{_mlp_pallas.1} parent=5 // pred_fallthru
        _
      %p225 = scmp.le.s32.totalorder 1, %s17
      %p226 = scmp.lt.s32.totalorder %s17, 3
      %p227 = pnand %p225, %p226
      %p228 = pneg %p227
      // Predicated region
      $region37: #{_mlp_pallas.1} parent=5 // pred_check
        _
      $region38: #{_mlp_pallas.1} parent=5 // pred_check_branch
        %230 = sbr.rel (%p227) target = $region40
      $region39: #{_mlp_pallas.1} parent=5 // pred_region
        %s231 = ssub.s32 %s17, 1
        %s232 = sand.u32 %s30, 1
        %s233 = scalar_lea.sflag [#allocation4], %s232
        %s234 = sand.u32 %s30, 1
        %s235 = smul.addr %s234, 8
        %s236 = scalar_lea.vmem [#allocation3], %s235
        // Predicated region
        $region41: #{_mlp_pallas.1} parent=39 // pred_check
          %p237 = pneg %p43
        $region42: #{_mlp_pallas.1} parent=39 // pred_check_branch
          %239 = sbr.rel (%p237) target = $region44
        $region43: #{_mlp_pallas.1} parent=39 // pred_region
          %241 = dma.done %s233, 128
        $region44: #{_mlp_pallas.1} parent=39 // pred_fallthru
          _
        // Predicated region
        $region45: #{_mlp_pallas.1} parent=39 // pred_check
          %p242 = pneg %p64
        $region46: #{_mlp_pallas.1} parent=39 // pred_check_branch
          %244 = sbr.rel (%p242) target = $region48
        $region47: #{_mlp_pallas.1} parent=39 // pred_region
          %246 = dma.done [#allocation6], 256
        $region48: #{_mlp_pallas.1} parent=39 // pred_fallthru
          _
        // Predicated region
        $region49: #{_mlp_pallas.1} parent=39 // pred_check
          %p247 = pneg %p106
        $region50: #{_mlp_pallas.1} parent=39 // pred_check_branch
          %249 = sbr.rel (%p247) target = $region52
        $region51: #{_mlp_pallas.1} parent=39 // pred_region
          %251 = dma.done [#allocation6], 1024
        $region52: #{_mlp_pallas.1} parent=39 // pred_fallthru
          _
        %s252 = sand.u32 %s30, 1
        %s253 = scalar_lea.sflag [#allocation4], %s252
        %s254 = sand.u32 %s30, 1
        %s255 = smul.addr %s254, 8
        %s256 = scalar_lea.vmem [#allocation3], %s255
        %p257 = pneg %p43
        %p258 = pneg %p40
        %p259 = pneg %p64
        %p260 = pneg %p61
        %p261 = pneg %p85
        %p262 = pneg %p82
        %p263 = pneg %p106
        %p264 = pneg %p103
        %p265 = pneg %p127
        %p266 = pneg %p124
        %p267 = pneg %p153
        %p268 = pneg %p150
        %p269 = scmp.lt.s32.totalorder %s22, 1
        %s270 = scalar_select %p269, %s22, 1
        %s271 = smul.addr %s270, 8
        %s272 = scalar_lea.vmem %s5, %s271
        %p273 = scmp.lt.s32.totalorder %s22, 1
        %s274 = scalar_select %p273, %s22, 1
        %s275 = smul.addr %s274, 8
        %s276 = scalar_lea.vmem %s5, %s275
        %v278 = vld [vmem:[%s236] sm:$0xff]
        %v279 = vpack.c.bf16 %v278, %v278
        %v280 = vld [vmem:[#allocation5] sm:$0xf]
        %v281 = vld [vmem:[#allocation5 + $0x4] sm:$0xf]
        %v282 = vld [vmem:[#allocation5 + $0x8] sm:$0xf]
        %v283 = vld [vmem:[#allocation5 + $0xc] sm:$0xf]
        %v284 = vld [vmem:[%s2] sm:$0x1]
        %v286 = vperm.slane %v284, 0
        %v292 = vunpack.c.l.b16 %v280
        %v293 = vunpack.c.l.b16 %v281
        %v294 = vunpack.c.l.b16 %v282
        %v295 = vunpack.c.l.b16 %v283
        %v296 = vpack.c.b16 %v293, %v292
        %v297 = vpack.c.b16 %v295, %v294
        %vm300 = vcmask 261120
        %v302 = vsel %vm300, %v279, 0
        %304 = vmatpush.bf16.msra.mxu0 0
        %305 = vmatpush.bf16.msra.mxu0 0
        %306 = vmatpush.bf16.msra.mxu0 0
        %307 = vmatpush.bf16.msra.mxu0 0
        %308 = vmatpush.bf16.msra.mxu0 0
        %309 = vmatpush.bf16.msra.mxu0 0
        %310 = vmatpush.bf16.msra.mxu0 %v297
        %311 = vmatpush.bf16.msra.mxu0 %v296
        %312 = vmatmul.bf16.gmra.mxu0 %v302
        %v313 = vpop.f32.mrf.mxu0
        %v314 = vadd.f32 %v286, %v313
        %v315 = vpop.f32.mrf.mxu0
        %316 = vdwg.mxu0
        %v317 = vmax.f32 %v314, 0.0
        %v318 = vpack.c.bf16 %v317, %v317
        %v319 = vld [vmem:[#allocation7] sm:$0xf]
        %v320 = vld [vmem:[#allocation7 + $0x4] sm:$0xf]
        %v321 = vld [vmem:[#allocation7 + $0x8] sm:$0xf]
        %v322 = vld [vmem:[#allocation7 + $0xc] sm:$0xf]
        %v323 = vld [vmem:[#allocation7 + $0x10] sm:$0xf]
        %v324 = vld [vmem:[#allocation7 + $0x14] sm:$0xf]
        %v325 = vld [vmem:[#allocation7 + $0x18] sm:$0xf]
        %v326 = vld [vmem:[#allocation7 + $0x1c] sm:$0xf]
        %v327 = vld [vmem:[#allocation7 + $0x20] sm:$0xf]
        %v328 = vld [vmem:[#allocation7 + $0x24] sm:$0xf]
        %v329 = vld [vmem:[#allocation7 + $0x28] sm:$0xf]
        %v330 = vld [vmem:[#allocation7 + $0x2c] sm:$0xf]
        %v331 = vld [vmem:[#allocation7 + $0x30] sm:$0xf]
        %v332 = vld [vmem:[#allocation7 + $0x34] sm:$0xf]
        %v333 = vld [vmem:[#allocation7 + $0x38] sm:$0xf]
        %v334 = vld [vmem:[#allocation7 + $0x3c] sm:$0xf]
        %v351 = vunpack.c.l.b16 %v319
        %v352 = vunpack.c.l.b16 %v320
        %v353 = vunpack.c.l.b16 %v321
        %v354 = vunpack.c.l.b16 %v322
        %v355 = vunpack.c.l.b16 %v323
        %v356 = vunpack.c.l.b16 %v324
        %v357 = vunpack.c.l.b16 %v325
        %v358 = vunpack.c.l.b16 %v326
        %v359 = vunpack.c.l.b16 %v327
        %v360 = vunpack.c.l.b16 %v328
        %v361 = vunpack.c.l.b16 %v329
        %v362 = vunpack.c.l.b16 %v330
        %v363 = vunpack.c.l.b16 %v331
        %v364 = vunpack.c.l.b16 %v332
        %v365 = vunpack.c.l.b16 %v333
        %v366 = vunpack.c.l.b16 %v334
        %v367 = vpack.c.b16 %v352, %v351
        %v368 = vpack.c.b16 %v354, %v353
        %v369 = vpack.c.b16 %v356, %v355
        %v370 = vpack.c.b16 %v358, %v357
        %v371 = vpack.c.b16 %v360, %v359
        %v372 = vpack.c.b16 %v362, %v361
        %v373 = vpack.c.b16 %v364, %v363
        %v374 = vpack.c.b16 %v366, %v365
        %383 = vmatpush.bf16.msra.mxu0 %v374
        %384 = vmatpush.bf16.msra.mxu0 %v373
        %385 = vmatpush.bf16.msra.mxu0 %v372
        %386 = vmatpush.bf16.msra.mxu0 %v371
        %387 = vmatpush.bf16.msra.mxu0 %v370
        %388 = vmatpush.bf16.msra.mxu0 %v369
        %389 = vmatpush.bf16.msra.mxu0 %v368
        %390 = vmatpush.bf16.msra.mxu0 %v367
        %391 = vmatmul.bf16.gmra.mxu0 %v318
        %v392 = vpop.f32.mrf.mxu0
        %v393 = vadd.f32 0.0, %v392
        %v394 = vpop.f32.mrf.mxu0
        %395 = vdwg.mxu0
        %v396 = vld [vmem:[#allocation2] sm:$0x1]
        %v398 = vperm.slane %v396, 0
        %v400 = vadd.f32 %v393, %v398
        %vm401 = vcmask 7168
        %402 = vst.msk [vmem:[%s276] sm:$0xff] %vm401, %v400
        %p403 = scmp.lt.s32.totalorder %s22, 1
        %s404 = scalar_select %p403, %s22, 1
        %s405 = smul.addr %s404, 8
        %s406 = scalar_lea.vmem %s5, %s405
        // Predicated region
        $region53: #{_mlp_pallas.1} parent=39 // pred_check
          %p407 = pneg %p150
        $region54: #{_mlp_pallas.1} parent=39 // pred_check_branch
          %409 = sbr.rel (%p407) target = $region56
        $region55: #{_mlp_pallas.1} parent=39 // pred_region
          _
        $region56: #{_mlp_pallas.1} parent=39 // pred_fallthru
          _
      $region40: #{_mlp_pallas.1} parent=5 // pred_fallthru
        _
      %p410 = scmp.le.s32.totalorder 2, %s17
      // Predicated region
      $region57: #{_mlp_pallas.1} parent=5 // pred_check
        %p411 = pneg %p410
      $region58: #{_mlp_pallas.1} parent=5 // pred_check_branch
        %413 = sbr.rel (%p411) target = $region60
      $region59: #{_mlp_pallas.1} parent=5 // pred_region
        %s414 = ssub.s32 %s17, 2
        // Predicated region
        $region61: #{_mlp_pallas.1} parent=59 // pred_check
          %p415 = pneg %p156
        $region62: #{_mlp_pallas.1} parent=59 // pred_check_branch
          %417 = sbr.rel (%p415) target = $region64
        $region63: #{_mlp_pallas.1} parent=59 // pred_region
          %p418 = scmp.lt.s32.totalorder %s23, 1
          %s419 = scalar_select %p418, %s23, 1
          %s420 = smul.addr %s419, 8
          %s421 = scalar_lea.vmem %s5, %s420
        $region64: #{_mlp_pallas.1} parent=59 // pred_fallthru
          _
      $region60: #{_mlp_pallas.1} parent=5 // pred_fallthru
        _
    $region6: #{_mlp_pallas.1} parent=1 // loop_footer
      %s21 = sadd.s32 1, %s17
    $region7: #{_mlp_pallas.1} parent=1 // loop_footer_branch
      %16 = sbr.rel target = $region3
    $region8: #{_mlp_pallas.1} parent=1 // loop_exit
      _
    %422 = vsyncpa [#allocation4], 1
    %s423 = scalar_lea.sflag [#allocation4], 1
    %424 = vsyncpa %s423, 1
    %425 = vsyncpa [#allocation6], 1

</llo_original>
